<compile_context>
chip_gen: v7x
topology: tpu7x:2x2x1
jax: 0.10.0
libtpu: 0.0.40
codegen_flags: <defaults>
</compile_context>

<pallas_src>
import functools

import jax
import jax.numpy as jnp
from jax.experimental import pallas as pl
from jax.experimental.pallas import tpu as pltpu

OBS_DIM = 4       # env.observation_space.shape[0] for CartPole-v0
HIDDEN = 100      # fc1 out
N_ACTIONS = 2     # env.action_space.n for CartPole-v0

# Padded, layout-friendly sizes.
OBS_PAD = 8       # obs 4 -> 8 (sublane-aligned K for fc1)
HIDDEN_PAD = 128  # hidden 100 -> 128 (full vreg lane width)
OUT_PAD = 8       # actions 2 -> 8 (narrow output slab: 16x less writeback
                  # than a 128-wide f32 slab; block dim == full array dim)

MAX_TILE_B = 2048     # rows per grid step (per-step VMEM << scoped limit)
SMALL_BATCH_XLA = 64  # below this, plain XLA beats kernel dispatch overhead


def _round_up(x, m):
    return (x + m - 1) // m * m


def _choose_tile(batch):
    """Pick (tile_b, padded_batch).  For >=16 rows, force >=2 grid steps so a
    v7x megacore can split the parallel batch axis across both TensorCores."""
    b8 = _round_up(max(batch, 1), 8)
    if b8 <= 8:
        return 8, b8
    tile_b = min(MAX_TILE_B, _round_up(pl.cdiv(b8, 2), 8))
    return tile_b, _round_up(b8, tile_b)


def net_kernel(x_ref, w1_ref, b1_ref, w2_ref, b2_ref, o_ref):
    # fc1: (tile_b, 8) bf16 @ (8, 128) bf16 -> f32 accumulate on the MXU
    h = jnp.dot(x_ref[...], w1_ref[...], preferred_element_type=jnp.float32)
    # bias add + ReLU in f32 (VPU); padded hidden lanes stay exactly 0
    h = jnp.maximum(h + b1_ref[...], 0.0)
    # fc2: (tile_b, 128) bf16 @ (128, 8) bf16 -> f32 accumulate
    # (on v5e the bf16 re-pack of h is extra VPU work; acceptable here)
    y = jnp.dot(h.astype(w2_ref.dtype), w2_ref[...],
                preferred_element_type=jnp.float32)
    # narrow (tile_b, 8) store; real 2 action columns sliced outside
    o_ref[...] = (y + b2_ref[...]).astype(o_ref.dtype)


def prepare_params(w1, b1, w2, b2, compute_dtype=jnp.bfloat16):
    """One-time padding + bf16 cast of the weights (hoisted out of the
    per-call forward).  w1: (4,100), b1: (100,), w2: (100,2), b2: (2,)."""
    w1_p = jnp.zeros((OBS_PAD, HIDDEN_PAD), compute_dtype)
    w1_p = w1_p.at[:OBS_DIM, :HIDDEN].set(w1.astype(compute_dtype))
    b1_p = jnp.zeros((1, HIDDEN_PAD), jnp.float32)
    b1_p = b1_p.at[0, :HIDDEN].set(b1.astype(jnp.float32))
    w2_p = jnp.zeros((HIDDEN_PAD, OUT_PAD), compute_dtype)
    w2_p = w2_p.at[:HIDDEN, :N_ACTIONS].set(w2.astype(compute_dtype))
    b2_p = jnp.zeros((1, OUT_PAD), jnp.float32)
    b2_p = b2_p.at[0, :N_ACTIONS].set(b2.astype(jnp.float32))
    return w1_p, b1_p, w2_p, b2_p


def net_forward_pallas(x, w1_p, b1_p, w2_p, b2_p):
    """x: (B, 4) f32; padded params from prepare_params().  Returns (B, 2) f32."""
    B = x.shape[0]
    compute_dtype = w1_p.dtype
    tile_b, B_pad = _choose_tile(B)

    # Only the activations need per-call padding (zero rows/lanes contribute
    # nothing and are sliced away at the end).
    x_p = jnp.zeros((B_pad, OBS_PAD), compute_dtype)
    x_p = x_p.at[:B, :OBS_DIM].set(x.astype(compute_dtype))

    grid = (B_pad // tile_b,)
    # Resident operands: constant index_map -> loaded once, stay in VMEM.
    # (pipeline_mode=pl.Buffered(1) would shave ~34 KiB of redundant double
    #  buffering; left at the default for maximum portability.)
    resident = lambda shape: pl.BlockSpec(shape, lambda i: (0, 0))

    out_padded = pl.pallas_call(
        net_kernel,
        out_shape=jax.ShapeDtypeStruct((B_pad, OUT_PAD), jnp.float32),
        grid=grid,
        in_specs=[
            pl.BlockSpec((tile_b, OBS_PAD), lambda i: (i, 0)),  # x rows, tiled
            resident((OBS_PAD, HIDDEN_PAD)),                    # w1 (resident)
            resident((1, HIDDEN_PAD)),                          # b1 (resident)
            resident((HIDDEN_PAD, OUT_PAD)),                    # w2 (resident)
            resident((1, OUT_PAD)),                             # b2 (resident)
        ],
        out_specs=pl.BlockSpec((tile_b, OUT_PAD), lambda i: (i, 0)),
        compiler_params=pltpu.CompilerParams(
            dimension_semantics=("parallel",)),  # batch axis splits across TCs
    )(x_p, w1_p, b1_p, w2_p, b2_p)

    return out_padded[:B, :N_ACTIONS]


def net_forward(x, w1_p, b1_p, w2_p, b2_p, *, min_pallas_batch=SMALL_BATCH_XLA):
    """Size-based dispatch: tiny per-step RL batches go through plain XLA
    (dispatch + padding overhead > kernel time), bigger batches use Pallas."""
    if x.shape[0] < min_pallas_batch:
        h = jnp.dot(x.astype(w1_p.dtype), w1_p[:OBS_DIM, :HIDDEN],
                    preferred_element_type=jnp.float32) + b1_p[0, :HIDDEN]
        h = jnp.maximum(h, 0.0)
        return jnp.dot(h.astype(w2_p.dtype), w2_p[:HIDDEN, :N_ACTIONS],
                       preferred_element_type=jnp.float32) + b2_p[0, :N_ACTIONS]
    return net_forward_pallas(x, w1_p, b1_p, w2_p, b2_p)


def reference_forward(x, w1, b1, w2, b2, compute_dtype=jnp.bfloat16):
    """Plain-JAX reference with the same dtype pipeline as the kernel.
    (Matmul operands are bf16 in both paths, so this validates the kernel; it
    differs from true-f32 PyTorch by ~1e-3 relative, fine for policy logits.)"""
    h = jnp.dot(x.astype(compute_dtype), w1.astype(compute_dtype),
                preferred_element_type=jnp.float32) + b1
    h = jnp.maximum(h, 0.0)
    y = jnp.dot(h.astype(compute_dtype), w2.astype(compute_dtype),
                preferred_element_type=jnp.float32) + b2
    return y


def init_params(key):
    # Mimics PyTorch nn.Linear default init: U(-1/sqrt(fan_in), 1/sqrt(fan_in)).
    k1, k2, k3, k4 = jax.random.split(key, 4)
    bound1 = 1.0 / jnp.sqrt(jnp.float32(OBS_DIM))
    bound2 = 1.0 / jnp.sqrt(jnp.float32(HIDDEN))
    # stored as (in, out): kernel does x @ W, equivalent to torch's x @ W^T
    w1 = jax.random.uniform(k1, (OBS_DIM, HIDDEN), jnp.float32, -bound1, bound1)
    b1 = jax.random.uniform(k2, (HIDDEN,), jnp.float32, -bound1, bound1)
    w2 = jax.random.uniform(k3, (HIDDEN, N_ACTIONS), jnp.float32, -bound2, bound2)
    b2 = jax.random.uniform(k4, (N_ACTIONS,), jnp.float32, -bound2, bound2)
    return w1, b1, w2, b2


if __name__ == "__main__":
    key = jax.random.PRNGKey(0)
    kx, kx2, kp = jax.random.split(key, 3)
    w1, b1, w2, b2 = init_params(kp)

    # Hoisted (one-time) weight padding + cast.
    padded = prepare_params(w1, b1, w2, b2)
    padded = jax.tree_util.tree_map(jax.block_until_ready, padded)

    fwd_pallas = jax.jit(net_forward_pallas)
    fwd_auto = jax.jit(functools.partial(net_forward,
                                         min_pallas_batch=SMALL_BATCH_XLA))

    # Small batch through the Pallas kernel (single grid step).
    B = 8
    x = jax.random.normal(kx, (B, OBS_DIM), jnp.float32)
    out = fwd_pallas(x, *padded)
    jax.block_until_ready(out)
    ref = reference_forward(x, w1, b1, w2, b2)
    assert out.shape == (B, N_ACTIONS)
    assert jnp.allclose(out, ref, atol=1e-3, rtol=1e-3)

    # Same small batch through the size-dispatched path (XLA fallback).
    out_small = fwd_auto(x, *padded)
    jax.block_until_ready(out_small)
    assert jnp.allclose(out_small, ref, atol=1e-3, rtol=1e-3)

    # Larger, non-multiple-of-tile batch: exercises the multi-step batch grid
    # (>=2 steps so a v7x megacore splits it), resident weights and row padding.
    B2 = 1000
    x2 = jax.random.normal(kx2, (B2, OBS_DIM), jnp.float32)
    out2 = fwd_pallas(x2, *padded)
    jax.block_until_ready(out2)
    ref2 = reference_forward(x2, w1, b1, w2, b2)
    assert out2.shape == (B2, N_ACTIONS)
    assert jnp.allclose(out2, ref2, atol=1e-3, rtol=1e-3)

    print("KERNEL_OK")
</pallas_src>

<mosaic_0001>
module attributes {stable_mosaic.version = 11 : i64} {
  func.func @net_kernel(%arg0: i32, %arg1: memref<8x8xbf16, #tpu.memory_space<vmem>>, %arg2: memref<8x128xbf16, #tpu.memory_space<vmem>>, %arg3: memref<1x128xf32, #tpu.memory_space<vmem>>, %arg4: memref<128x8xbf16, #tpu.memory_space<vmem>>, %arg5: memref<1x8xf32, #tpu.memory_space<vmem>>, %arg6: memref<8x8xf32, #tpu.memory_space<vmem>>) attributes {dimension_semantics = [#tpu.dimension_semantics<parallel>], iteration_bounds = array<i64: 1>, scalar_prefetch = 0 : i64, scratch_operands = 0 : i64, tpu.core_type = #tpu.core_type<tc>, window_params = [{transform_indices = @transform_0, window_bounds = array<i64: 8, 8>}, {pipeline_mode = #tpu.pipeline_mode<synchronous>, transform_indices = @transform_1, window_bounds = array<i64: 8, 128>}, {pipeline_mode = #tpu.pipeline_mode<synchronous>, transform_indices = @transform_2, window_bounds = array<i64: 1, 128>}, {pipeline_mode = #tpu.pipeline_mode<synchronous>, transform_indices = @transform_3, window_bounds = array<i64: 128, 8>}, {pipeline_mode = #tpu.pipeline_mode<synchronous>, transform_indices = @transform_4, window_bounds = array<i64: 1, 8>}, {transform_indices = @transform_5, window_bounds = array<i64: 8, 8>}]} {
    %c0 = arith.constant 0 : index
    %c0_0 = arith.constant 0 : index
    %0 = vector.load %arg1[%c0, %c0_0] : memref<8x8xbf16, #tpu.memory_space<vmem>>, vector<8x8xbf16>
    %c0_1 = arith.constant 0 : index
    %c0_2 = arith.constant 0 : index
    %1 = vector.load %arg2[%c0_1, %c0_2] : memref<8x128xbf16, #tpu.memory_space<vmem>>, vector<8x128xbf16>
    %cst = arith.constant dense<0.000000e+00> : vector<8x128xf32>
    %2 = tpu.matmul %0, %1, %cst {dimension_numbers = #tpu.dot_dimension_numbers<[1], [0], [0], [1], [0, 0, 1, 1], [], []>} : vector<8x8xbf16>, vector<8x128xbf16>, vector<8x128xf32> -> vector<8x128xf32>
    %c0_3 = arith.constant 0 : index
    %c0_4 = arith.constant 0 : index
    %3 = vector.load %arg3[%c0_3, %c0_4] : memref<1x128xf32, #tpu.memory_space<vmem>>, vector<1x128xf32>
    %4 = vector.broadcast %3 : vector<1x128xf32> to vector<8x128xf32>
    %5 = arith.addf %2, %4 : vector<8x128xf32>
    %cst_5 = arith.constant 0.000000e+00 : f32
    %6 = vector.broadcast %cst_5 : f32 to vector<8x128xf32>
    %7 = arith.maximumf %5, %6 : vector<8x128xf32>
    %8 = arith.truncf %7 : vector<8x128xf32> to vector<8x128xbf16>
    %c0_6 = arith.constant 0 : index
    %c0_7 = arith.constant 0 : index
    %9 = vector.load %arg4[%c0_6, %c0_7] : memref<128x8xbf16, #tpu.memory_space<vmem>>, vector<128x8xbf16>
    %cst_8 = arith.constant dense<0.000000e+00> : vector<8x8xf32>
    %10 = tpu.matmul %8, %9, %cst_8 {dimension_numbers = #tpu.dot_dimension_numbers<[1], [0], [0], [1], [0, 0, 1, 1], [], []>} : vector<8x128xbf16>, vector<128x8xbf16>, vector<8x8xf32> -> vector<8x8xf32>
    %c0_9 = arith.constant 0 : index
    %c0_10 = arith.constant 0 : index
    %11 = vector.load %arg5[%c0_9, %c0_10] : memref<1x8xf32, #tpu.memory_space<vmem>>, vector<1x8xf32>
    %12 = vector.broadcast %11 : vector<1x8xf32> to vector<8x8xf32>
    %13 = arith.addf %10, %12 : vector<8x8xf32>
    %c0_11 = arith.constant 0 : index
    %c0_12 = arith.constant 0 : index
    %14 = vector.load %arg6[%c0_11, %c0_12] : memref<8x8xf32, #tpu.memory_space<vmem>>, vector<8x8xf32>
    tpu.vector_store %arg6[%c0_11, %c0_12], %13 {strides = array<i32>} : memref<8x8xf32, #tpu.memory_space<vmem>>, vector<8x8xf32>,
    return
  }
  func.func @transform_0(%arg0: i32) -> (i32, i32) {
    %c0_i32 = arith.constant 0 : i32
    %c0_i32_0 = arith.constant 0 : i32
    return %arg0, %c0_i32 : i32, i32
  }
  func.func @transform_1(%arg0: i32) -> (i32, i32) {
    %c0_i32 = arith.constant 0 : i32
    %c0_i32_0 = arith.constant 0 : i32
    %c0_i32_1 = arith.constant 0 : i32
    return %c0_i32, %c0_i32_0 : i32, i32
  }
  func.func @transform_2(%arg0: i32) -> (i32, i32) {
    %c0_i32 = arith.constant 0 : i32
    %c0_i32_0 = arith.constant 0 : i32
    %c0_i32_1 = arith.constant 0 : i32
    return %c0_i32, %c0_i32_0 : i32, i32
  }
  func.func @transform_3(%arg0: i32) -> (i32, i32) {
    %c0_i32 = arith.constant 0 : i32
    %c0_i32_0 = arith.constant 0 : i32
    %c0_i32_1 = arith.constant 0 : i32
    return %c0_i32, %c0_i32_0 : i32, i32
  }
  func.func @transform_4(%arg0: i32) -> (i32, i32) {
    %c0_i32 = arith.constant 0 : i32
    %c0_i32_0 = arith.constant 0 : i32
    %c0_i32_1 = arith.constant 0 : i32
    return %c0_i32, %c0_i32_0 : i32, i32
  }
  func.func @transform_5(%arg0: i32) -> (i32, i32) {
    %c0_i32 = arith.constant 0 : i32
    %c0_i32_0 = arith.constant 0 : i32
    return %arg0, %c0_i32 : i32, i32
  }
}

</mosaic_0001>

<llo_original>
// kernel: net_forward_pallas.1
$region0: #{net_forward_pallas.1}
  #allocation0 [shape = 'u32[]', space=smem, size = 0x4, offset = 0x4, fixed_abs, tag = 'smem constant byte address 0x4 - core index']
  #allocation1 [shape = 'u32[144,128]{1,0:T(1,128)}', space=vmem, size = 0x12000, scoped, tag = 'internal scratch']
  %s0 = inlined_call_operand.vmem [shape: bf16[8,8], index: 0, kind: input, shape index: {}]
  %s1 = inlined_call_operand.vmem [shape: bf16[8,128], index: 1, kind: input, shape index: {}]
  %s2 = inlined_call_operand.vmem [shape: f32[1,128], index: 2, kind: input, shape index: {}]
  %s3 = inlined_call_operand.vmem [shape: bf16[128,8], index: 3, kind: input, shape index: {}]
  %s4 = inlined_call_operand.vmem [shape: f32[1,8], index: 4, kind: input, shape index: {}]
  %s5 = inlined_call_operand.vmem [shape: f32[8,8], index: 5, kind: output, shape index: {}]
  %s6 = sld [smem:[#allocation0]]
  $region30: #{net_forward_pallas.1} parent=0
    _
  %s8 = ssub.s32 1, %s6
  %s9 = scalar_select 0, %s8, %s6
  // Predicated region
  $region2: #{net_forward_pallas.1} parent=0 // pred_check
    _
  $region3: #{net_forward_pallas.1} parent=0 // pred_check_branch
    %11 = sbr.rel (0) target = $region5
  $region4: #{net_forward_pallas.1} parent=0 // pred_region
    _
  $region5: #{net_forward_pallas.1} parent=0 // pred_fallthru
    _
  // Predicated region
  $region6: #{net_forward_pallas.1} parent=0 // pred_check
    _
  $region7: #{net_forward_pallas.1} parent=0 // pred_check_branch
    %13 = sbr.rel (0) target = $region9
  $region8: #{net_forward_pallas.1} parent=0 // pred_region
    _
  $region9: #{net_forward_pallas.1} parent=0 // pred_fallthru
    _
  // Predicated region
  $region10: #{net_forward_pallas.1} parent=0 // pred_check
    _
  $region11: #{net_forward_pallas.1} parent=0 // pred_check_branch
    %15 = sbr.rel (0) target = $region13
  $region12: #{net_forward_pallas.1} parent=0 // pred_region
    _
  $region13: #{net_forward_pallas.1} parent=0 // pred_fallthru
    _
  // Predicated region
  $region14: #{net_forward_pallas.1} parent=0 // pred_check
    _
  $region15: #{net_forward_pallas.1} parent=0 // pred_check_branch
    %17 = sbr.rel (0) target = $region17
  $region16: #{net_forward_pallas.1} parent=0 // pred_region
    _
  $region17: #{net_forward_pallas.1} parent=0 // pred_fallthru
    _
  // Predicated region
  $region18: #{net_forward_pallas.1} parent=0 // pred_check
    _
  $region19: #{net_forward_pallas.1} parent=0 // pred_check_branch
    %19 = sbr.rel (0) target = $region21
  $region20: #{net_forward_pallas.1} parent=0 // pred_region
    _
  $region21: #{net_forward_pallas.1} parent=0 // pred_fallthru
    _
  %v21 = vld [vmem:[%s0] sm:$0xf]
  %v22 = vld [vmem:[%s1] sm:$0xf]
  %v23 = vld [vmem:[%s2] sm:$0x1]
  %v25 = vlaneseq
  %v26 = vshrl.u32 %v25, 7
  %v27 = vsub.s32 0, %v26
  %v28 = vrot.slane %v23, %v27
  %vm30 = vcmask 64512
  %v32 = vsel %vm30, %v21, 0
  %vm34 = vcmask 1043456
  %v36 = vsel %vm34, %v22, 0
  %38 = vmatprep.subr.bf16.mxu0 0
  %39 = vmatpush1.bf16.msra.mxu0 %v36
  %40 = vmatprep.subr.bf16.mxu0 0
  %41 = vmatpush1.bf16.msra.mxu0 0
  %42 = vmatprep.subr.bf16.mxu0 0
  %43 = vmatpush1.bf16.msra.mxu0 0
  %44 = vmatprep.subr.bf16.mxu0 0
  %45 = vmatpush1.bf16.msra.mxu0 0
  %46 = vmatprep.subr.bf16.mxu0 0
  %47 = vmatpush1.bf16.msra.mxu0 0
  %48 = vmatprep.subr.bf16.mxu0 0
  %49 = vmatpush1.bf16.msra.mxu0 0
  %50 = vmatprep.subr.bf16.mxu0 0
  %51 = vmatpush1.bf16.msra.mxu0 0
  %52 = vmatprep.subr.bf16.mxu0 0
  %53 = vmatpush1.bf16.msra.mxu0 0
  %54 = vmatprep.subr.bf16.mxu0 0
  %55 = vmatpush1.bf16.msra.mxu0 0
  %56 = vmatprep.subr.bf16.mxu0 0
  %57 = vmatpush1.bf16.msra.mxu0 0
  %58 = vmatprep.subr.bf16.mxu0 0
  %59 = vmatpush1.bf16.msra.mxu0 0
  %60 = vmatprep.subr.bf16.mxu0 0
  %61 = vmatpush1.bf16.msra.mxu0 0
  %62 = vmatprep.subr.bf16.mxu0 0
  %63 = vmatpush1.bf16.msra.mxu0 0
  %64 = vmatprep.subr.bf16.mxu0 0
  %65 = vmatpush1.bf16.msra.mxu0 0
  %66 = vmatprep.subr.bf16.mxu0 0
  %67 = vmatpush1.bf16.msra.mxu0 0
  %68 = vmatprep.subr.bf16.mxu0 0
  %69 = vmatpush1.bf16.msra.mxu0 0
  %70 = vmatprep.mubr.bf16.mxu0 0
  %71 = vmatmul.mubr.bf16.gmra.mrb[0].mxu0 %v32
  %v72 = vpop.f32.mrb[0].mxu0
  %v73 = vadd.f32 %v28, %v72
  %v74 = vpop.f32.mrb[0].mxu0
  %v75 = vpop.f32.mrb[0].mxu0
  %v76 = vpop.f32.mrb[0].mxu0
  %77 = vdwg.mxu0
  %v78 = vmax.f32 %v73, 0.0
  %v79 = vpack.c.bf16 %v78, %v78
  %v80 = vld [vmem:[%s3] sm:$0xf]
  %v81 = vld [vmem:[%s3 + $0x4] sm:$0xf]
  %v82 = vld [vmem:[%s3 + $0x8] sm:$0xf]
  %v83 = vld [vmem:[%s3 + $0xc] sm:$0xf]
  %v84 = vld [vmem:[%s3 + $0x10] sm:$0xf]
  %v85 = vld [vmem:[%s3 + $0x14] sm:$0xf]
  %v86 = vld [vmem:[%s3 + $0x18] sm:$0xf]
  %v87 = vld [vmem:[%s3 + $0x1c] sm:$0xf]
  %v88 = vld [vmem:[%s3 + $0x20] sm:$0xf]
  %v89 = vld [vmem:[%s3 + $0x24] sm:$0xf]
  %v90 = vld [vmem:[%s3 + $0x28] sm:$0xf]
  %v91 = vld [vmem:[%s3 + $0x2c] sm:$0xf]
  %v92 = vld [vmem:[%s3 + $0x30] sm:$0xf]
  %v93 = vld [vmem:[%s3 + $0x34] sm:$0xf]
  %v94 = vld [vmem:[%s3 + $0x38] sm:$0xf]
  %v95 = vld [vmem:[%s3 + $0x3c] sm:$0xf]
  %v96 = vld [vmem:[%s4] sm:$0x1]
  %v98 = vlaneseq
  %v99 = vshrl.u32 %v98, 7
  %v100 = vsub.s32 0, %v99
  %v101 = vrot.slane %v96, %v100
  %v119 = vunpack.c.l.b16 %v80
  %v120 = vunpack.c.l.b16 %v81
  %v121 = vunpack.c.l.b16 %v82
  %v122 = vunpack.c.l.b16 %v83
  %v123 = vunpack.c.l.b16 %v84
  %v124 = vunpack.c.l.b16 %v85
  %v125 = vunpack.c.l.b16 %v86
  %v126 = vunpack.c.l.b16 %v87
  %v127 = vunpack.c.l.b16 %v88
  %v128 = vunpack.c.l.b16 %v89
  %v129 = vunpack.c.l.b16 %v90
  %v130 = vunpack.c.l.b16 %v91
  %v131 = vunpack.c.l.b16 %v92
  %v132 = vunpack.c.l.b16 %v93
  %v133 = vunpack.c.l.b16 %v94
  %v134 = vunpack.c.l.b16 %v95
  %v135 = vpack.c.b16 %v120, %v119
  %v136 = vpack.c.b16 %v122, %v121
  %v137 = vpack.c.b16 %v124, %v123
  %v138 = vpack.c.b16 %v126, %v125
  %v139 = vpack.c.b16 %v128, %v127
  %v140 = vpack.c.b16 %v130, %v129
  %v141 = vpack.c.b16 %v132, %v131
  %v142 = vpack.c.b16 %v134, %v133
  %151 = vmatprep.subr.bf16.mxu0 0
  %152 = vmatpush1.bf16.msra.mxu0 %v135
  %153 = vmatprep.subr.bf16.mxu0 0
  %154 = vmatpush1.bf16.msra.mxu0 %v136
  %155 = vmatprep.subr.bf16.mxu0 0
  %156 = vmatpush1.bf16.msra.mxu0 %v137
  %157 = vmatprep.subr.bf16.mxu0 0
  %158 = vmatpush1.bf16.msra.mxu0 %v138
  %159 = vmatprep.subr.bf16.mxu0 0
  %160 = vmatpush1.bf16.msra.mxu0 %v139
  %161 = vmatprep.subr.bf16.mxu0 0
  %162 = vmatpush1.bf16.msra.mxu0 %v140
  %163 = vmatprep.subr.bf16.mxu0 0
  %164 = vmatpush1.bf16.msra.mxu0 %v141
  %165 = vmatprep.subr.bf16.mxu0 0
  %166 = vmatpush1.bf16.msra.mxu0 %v142
  %167 = vmatprep.subr.bf16.mxu0 0
  %168 = vmatpush1.bf16.msra.mxu0 0
  %169 = vmatprep.subr.bf16.mxu0 0
  %170 = vmatpush1.bf16.msra.mxu0 0
  %171 = vmatprep.subr.bf16.mxu0 0
  %172 = vmatpush1.bf16.msra.mxu0 0
  %173 = vmatprep.subr.bf16.mxu0 0
  %174 = vmatpush1.bf16.msra.mxu0 0
  %175 = vmatprep.subr.bf16.mxu0 0
  %176 = vmatpush1.bf16.msra.mxu0 0
  %177 = vmatprep.subr.bf16.mxu0 0
  %178 = vmatpush1.bf16.msra.mxu0 0
  %179 = vmatprep.subr.bf16.mxu0 0
  %180 = vmatpush1.bf16.msra.mxu0 0
  %181 = vmatprep.subr.bf16.mxu0 0
  %182 = vmatpush1.bf16.msra.mxu0 0
  %183 = vmatprep.mubr.bf16.mxu0 0
  %184 = vmatmul.mubr.bf16.gmra.mrb[0].mxu0 %v79
  %v185 = vpop.f32.mrb[0].mxu0
  %v186 = vadd.f32 %v101, %v185
  %v187 = vpop.f32.mrb[0].mxu0
  %v188 = vpop.f32.mrb[0].mxu0
  %v189 = vpop.f32.mrb[0].mxu0
  %190 = vdwg.mxu0
  %191 = vst.msk [vmem:[%s5] sm:$0xff] %vm30, %v186
  // Predicated region
  $region22: #{net_forward_pallas.1} parent=0 // pred_check
    _
  $region23: #{net_forward_pallas.1} parent=0 // pred_check_branch
    %193 = sbr.rel (0) target = $region25
  $region24: #{net_forward_pallas.1} parent=0 // pred_region
    _
  $region25: #{net_forward_pallas.1} parent=0 // pred_fallthru
    _
  // Predicated region
  $region26: #{net_forward_pallas.1} parent=0 // pred_check
    _
  $region27: #{net_forward_pallas.1} parent=0 // pred_check_branch
    %195 = sbr.rel (0) target = $region29
  $region28: #{net_forward_pallas.1} parent=0 // pred_region
    _
  $region29: #{net_forward_pallas.1} parent=0 // pred_fallthru
    _

</llo_original>
